<compile_context>
chip_gen: v7x
topology: tpu7x:2x2x1
jax: 0.10.0
libtpu: 0.0.40
codegen_flags: <defaults>
</compile_context>

<pallas_src>
import jax
import jax.numpy as jnp
from jax.experimental import pallas as pl
from jax.experimental.pallas import tpu as pltpu


def _round_up(x: int, m: int) -> int:
    return ((x + m - 1) // m) * m


def _make_kernel(*, balance_loss, forecast_target, generative,
                 disc_lambda, tradeoff, out_dtype):
    disc_lambda = float(disc_lambda)
    tradeoff = float(tradeoff)
    f32 = jnp.float32

    def kernel(*refs):
        # ref order mirrors the wrapper's `arrays` list; out_ref is last.
        it = iter(refs)
        src_loss_ref = next(it)                       # (TB, 1)
        tgt_loss_ref = next(it)                       # (TB, 1)
        fc_loss_ref = None if forecast_target else next(it)   # (TB, 1)
        if balance_loss:
            src_scale_ref = next(it)                  # (TB, K)
            tgt_scale_ref = next(it)                  # (TB, K)
        src_prob_ref = next(it)                       # (TB, T_src)
        tgt_prob_ref = next(it)                       # (TB, T_tgt)
        out_ref = next(it)                            # (TB, 1)

        # ---- generative (forecasting) loss --------------------------------
        src_loss = src_loss_ref[...].astype(f32)
        tgt_loss = tgt_loss_ref[...].astype(f32)
        if not forecast_target:
            # tgt_loss = tgt_loss - tgt.tradeoff * tgt.fc_loss
            tgt_loss = tgt_loss - tradeoff * fc_loss_ref[...].astype(f32)
        if balance_loss:
            # weight = mean(tgt_scale / src_scale, dim=1)
            ratio = tgt_scale_ref[...].astype(f32) / src_scale_ref[...].astype(f32)
            weight = jnp.mean(ratio, axis=-1, keepdims=True)       # (TB, 1)
            src_loss = src_loss * weight
        gen_loss = src_loss + tgt_loss                              # (TB, 1)

        # ---- adversarial discriminator loss -------------------------------
        # disc = -mean(src_prob, 1) - mean(log(1 - exp(tgt_prob) + 1e-10), 1)
        src_term = jnp.mean(src_prob_ref[...].astype(f32),
                            axis=-1, keepdims=True)                 # (TB, 1)
        log1m = jnp.log(1.0 - jnp.exp(tgt_prob_ref[...].astype(f32)) + 1e-10)
        tgt_term = jnp.mean(log1m, axis=-1, keepdims=True)          # (TB, 1)
        disc_loss = -src_term - tgt_term                            # (TB, 1)

        if generative:
            # adv_type == 'grad_rev'
            out_ref[...] = (gen_loss - disc_lambda * disc_loss).astype(out_dtype)
        else:
            out_ref[...] = disc_loss.astype(out_dtype)

    return kernel


def adversarial_domadapt_loss(src_loss, tgt_loss, fc_loss,
                              src_scale, tgt_scale,
                              src_prob_domain, tgt_prob_domain,
                              *, balance_loss=True, forecast_target=True,
                              generative=True, disc_lambda=1.0, tradeoff=1.0,
                              vmem_tile_budget_bytes=8 << 20):
    """Fused per-batch loss of AdversarialDomAdaptEstimator.forward."""
    B = src_loss.shape[0]
    out_dtype = src_loss.dtype

    # Only free, contiguous reshapes -- no stack / pad / concat / transpose.
    src_loss2 = src_loss.reshape(B, 1)
    tgt_loss2 = tgt_loss.reshape(B, 1)
    fc_loss2 = fc_loss.reshape(B, 1)
    src_sc = src_scale.reshape(B, -1)
    tgt_sc = tgt_scale.reshape(B, -1)
    src_pb = src_prob_domain.reshape(B, -1)
    tgt_pb = tgt_prob_domain.reshape(B, -1)
    K = src_sc.shape[1]
    T_src, T_tgt = src_pb.shape[1], tgt_pb.shape[1]

    # Inputs actually needed by this config (fewer DMAs per grid step).
    arrays, widths = [src_loss2, tgt_loss2], [1, 1]
    if not forecast_target:
        arrays.append(fc_loss2); widths.append(1)
    if balance_loss:
        arrays += [src_sc, tgt_sc]; widths += [K, K]
    arrays += [src_pb, tgt_pb]; widths += [T_src, T_tgt]

    # ---- batch tile selection ---------------------------------------------
    # Largest 8-aligned batch tile whose double-buffered footprint fits the
    # VMEM budget (cap 2048 rows).  Small batches use a single full block (no
    # grid overhead); large single-block batches are split into >= 2 tiles so
    # v7x's second TensorCore gets work via the "parallel" grid axis.
    row_bytes = (sum(widths) + 1) * 4          # f32 compute budget per batch row
    TB = max(8, min(2048, (vmem_tile_budget_bytes // (2 * row_bytes)) // 8 * 8))
    if B <= TB:
        TB = _round_up((B + 1) // 2, 8) if B >= 1024 else B
    num_tiles = pl.cdiv(B, TB)

    in_specs = [pl.BlockSpec((TB, w), lambda i: (i, 0)) for w in widths]

    kernel = _make_kernel(balance_loss=balance_loss,
                          forecast_target=forecast_target,
                          generative=generative,
                          disc_lambda=disc_lambda,
                          tradeoff=tradeoff,
                          out_dtype=out_dtype)

    out = pl.pallas_call(
        kernel,
        out_shape=jax.ShapeDtypeStruct((B, 1), out_dtype),
        grid_spec=pltpu.PrefetchScalarGridSpec(
            num_scalar_prefetch=0,
            grid=(num_tiles,),
            in_specs=in_specs,
            out_specs=pl.BlockSpec((TB, 1), lambda i: (i, 0)),
        ),
        compiler_params=pltpu.CompilerParams(
            dimension_semantics=("parallel",),     # v7x: split tiles across TCs
            vmem_limit_bytes=32 * 1024 * 1024,
        ),
    )(*arrays)
    return out.reshape(B)                           # free bitcast, no slice


def _reference(src_loss, tgt_loss, fc_loss, src_scale, tgt_scale,
               src_prob, tgt_prob, *, balance_loss=True, forecast_target=True,
               generative=True, disc_lambda=1.0, tradeoff=1.0):
    B = src_loss.shape[0]
    tgt_l = tgt_loss
    if not forecast_target:
        tgt_l = tgt_l - tradeoff * fc_loss
    src_l = src_loss
    if balance_loss:
        weight = jnp.mean(tgt_scale.reshape(B, -1) / src_scale.reshape(B, -1), axis=1)
        src_l = src_l * weight
    gen = src_l + tgt_l
    disc = (-jnp.mean(src_prob.reshape(B, -1), axis=1)
            - jnp.mean(jnp.log(1.0 - jnp.exp(tgt_prob.reshape(B, -1)) + 1e-10), axis=1))
    return gen - disc_lambda * disc if generative else disc


if __name__ == "__main__":
    key = jax.random.PRNGKey(0)
    B, K, T = 8, 16, 64   # batch, scale features, discriminator time steps
    ks = jax.random.split(key, 7)

    # Deterministic synthetic stand-ins for the sub-module outputs.
    src_loss = jax.random.uniform(ks[0], (B,), jnp.float32, 0.1, 2.0)
    tgt_loss = jax.random.uniform(ks[1], (B,), jnp.float32, 0.1, 2.0)
    fc_loss = jax.random.uniform(ks[2], (B,), jnp.float32, 0.1, 1.0)
    # Normalizer scales are strictly positive buffers of shape (B, 1, K).
    src_scale = jnp.abs(jax.random.normal(ks[3], (B, 1, K), jnp.float32)) + 0.5
    tgt_scale = jnp.abs(jax.random.normal(ks[4], (B, 1, K), jnp.float32)) + 0.5
    # prob_domain are log-probabilities (<= 0), so exp(.) < 1 and log1m is safe.
    src_prob = -jnp.abs(jax.random.normal(ks[5], (B, T), jnp.float32)) - 0.05
    tgt_prob = -jnp.abs(jax.random.normal(ks[6], (B, T), jnp.float32)) - 0.05

    configs = [
        dict(balance_loss=True, forecast_target=True, generative=True),
        dict(balance_loss=True, forecast_target=False, generative=True),
        dict(balance_loss=True, forecast_target=True, generative=False),
        dict(balance_loss=False, forecast_target=True, generative=True),
    ]

    ok = True
    for cfg in configs:
        loss = adversarial_domadapt_loss(
            src_loss, tgt_loss, fc_loss, src_scale, tgt_scale, src_prob, tgt_prob,
            disc_lambda=1.0, tradeoff=1.0, **cfg)
        loss = jax.block_until_ready(loss)
        ref = _reference(
            src_loss, tgt_loss, fc_loss, src_scale, tgt_scale, src_prob, tgt_prob,
            disc_lambda=1.0, tradeoff=1.0, **cfg)
        assert loss.shape == (B,)
        ok = ok and bool(jnp.allclose(loss, ref, rtol=1e-5, atol=1e-5))
        assert ok, (cfg, loss, ref)

    print("KERNEL_OK")
</pallas_src>

<mosaic_0001>
module attributes {stable_mosaic.version = 11 : i64} {
  func.func @kernel(%arg0: i32, %arg1: memref<8x1xf32, #tpu.memory_space<vmem>>, %arg2: memref<8x1xf32, #tpu.memory_space<vmem>>, %arg3: memref<8x16xf32, #tpu.memory_space<vmem>>, %arg4: memref<8x16xf32, #tpu.memory_space<vmem>>, %arg5: memref<8x64xf32, #tpu.memory_space<vmem>>, %arg6: memref<8x64xf32, #tpu.memory_space<vmem>>, %arg7: memref<8x1xf32, #tpu.memory_space<vmem>>) attributes {dimension_semantics = [#tpu.dimension_semantics<parallel>], iteration_bounds = array<i64: 1>, scalar_prefetch = 0 : i64, scratch_operands = 0 : i64, tpu.core_type = #tpu.core_type<tc>, window_params = [{transform_indices = @transform_0, window_bounds = array<i64: 8, 1>}, {transform_indices = @transform_1, window_bounds = array<i64: 8, 1>}, {transform_indices = @transform_2, window_bounds = array<i64: 8, 16>}, {transform_indices = @transform_3, window_bounds = array<i64: 8, 16>}, {transform_indices = @transform_4, window_bounds = array<i64: 8, 64>}, {transform_indices = @transform_5, window_bounds = array<i64: 8, 64>}, {transform_indices = @transform_6, window_bounds = array<i64: 8, 1>}]} {
    %c0 = arith.constant 0 : index
    %c0_0 = arith.constant 0 : index
    %0 = vector.load %arg1[%c0, %c0_0] : memref<8x1xf32, #tpu.memory_space<vmem>>, vector<8x1xf32>
    %c0_1 = arith.constant 0 : index
    %c0_2 = arith.constant 0 : index
    %1 = vector.load %arg2[%c0_1, %c0_2] : memref<8x1xf32, #tpu.memory_space<vmem>>, vector<8x1xf32>
    %c0_3 = arith.constant 0 : index
    %c0_4 = arith.constant 0 : index
    %2 = vector.load %arg4[%c0_3, %c0_4] : memref<8x16xf32, #tpu.memory_space<vmem>>, vector<8x16xf32>
    %c0_5 = arith.constant 0 : index
    %c0_6 = arith.constant 0 : index
    %3 = vector.load %arg3[%c0_5, %c0_6] : memref<8x16xf32, #tpu.memory_space<vmem>>, vector<8x16xf32>
    %4 = arith.divf %2, %3 : vector<8x16xf32>
    %cst = arith.constant dense<0.000000e+00> : vector<8xf32>
    %5 = vector.multi_reduction <add>, %4, %cst [1] : vector<8x16xf32> to vector<8xf32>
    %6 = vector.shape_cast %5 : vector<8xf32> to vector<8x1xf32>
    %cst_7 = arith.constant 1.600000e+01 : f32
    %7 = vector.broadcast %cst_7 : f32 to vector<8x1xf32>
    %8 = arith.divf %6, %7 : vector<8x1xf32>
    %9 = arith.mulf %0, %8 : vector<8x1xf32>
    %10 = arith.addf %9, %1 : vector<8x1xf32>
    %c0_8 = arith.constant 0 : index
    %c0_9 = arith.constant 0 : index
    %11 = vector.load %arg5[%c0_8, %c0_9] : memref<8x64xf32, #tpu.memory_space<vmem>>, vector<8x64xf32>
    %cst_10 = arith.constant dense<0.000000e+00> : vector<8xf32>
    %12 = vector.multi_reduction <add>, %11, %cst_10 [1] : vector<8x64xf32> to vector<8xf32>
    %13 = vector.shape_cast %12 : vector<8xf32> to vector<8x1xf32>
    %cst_11 = arith.constant 6.400000e+01 : f32
    %14 = vector.broadcast %cst_11 : f32 to vector<8x1xf32>
    %15 = arith.divf %13, %14 : vector<8x1xf32>
    %c0_12 = arith.constant 0 : index
    %c0_13 = arith.constant 0 : index
    %16 = vector.load %arg6[%c0_12, %c0_13] : memref<8x64xf32, #tpu.memory_space<vmem>>, vector<8x64xf32>
    %17 = math.exp %16 : vector<8x64xf32>
    %cst_14 = arith.constant 1.000000e+00 : f32
    %18 = vector.broadcast %cst_14 : f32 to vector<8x64xf32>
    %19 = arith.subf %18, %17 : vector<8x64xf32>
    %cst_15 = arith.constant 1.000000e-10 : f32
    %20 = vector.broadcast %cst_15 : f32 to vector<8x64xf32>
    %21 = arith.addf %19, %20 : vector<8x64xf32>
    %22 = math.log %21 : vector<8x64xf32>
    %cst_16 = arith.constant dense<0.000000e+00> : vector<8xf32>
    %23 = vector.multi_reduction <add>, %22, %cst_16 [1] : vector<8x64xf32> to vector<8xf32>
    %24 = vector.shape_cast %23 : vector<8xf32> to vector<8x1xf32>
    %cst_17 = arith.constant 6.400000e+01 : f32
    %25 = vector.broadcast %cst_17 : f32 to vector<8x1xf32>
    %26 = arith.divf %24, %25 : vector<8x1xf32>
    %cst_18 = arith.constant 0.000000e+00 : f32
    %27 = vector.broadcast %cst_18 : f32 to vector<8x1xf32>
    %28 = arith.subf %27, %15 : vector<8x1xf32>
    %29 = arith.subf %28, %26 : vector<8x1xf32>
    %cst_19 = arith.constant 1.000000e+00 : f32
    %30 = vector.broadcast %cst_19 : f32 to vector<8x1xf32>
    %31 = arith.mulf %30, %29 : vector<8x1xf32>
    %32 = arith.subf %10, %31 : vector<8x1xf32>
    %c0_20 = arith.constant 0 : index
    %c0_21 = arith.constant 0 : index
    %33 = vector.load %arg7[%c0_20, %c0_21] : memref<8x1xf32, #tpu.memory_space<vmem>>, vector<8x1xf32>
    tpu.vector_store %arg7[%c0_20, %c0_21], %32 {strides = array<i32>} : memref<8x1xf32, #tpu.memory_space<vmem>>, vector<8x1xf32>,
    return
  }
  func.func @transform_0(%arg0: i32) -> (i32, i32) {
    %c0_i32 = arith.constant 0 : i32
    %c0_i32_0 = arith.constant 0 : i32
    return %arg0, %c0_i32 : i32, i32
  }
  func.func @transform_1(%arg0: i32) -> (i32, i32) {
    %c0_i32 = arith.constant 0 : i32
    %c0_i32_0 = arith.constant 0 : i32
    return %arg0, %c0_i32 : i32, i32
  }
  func.func @transform_2(%arg0: i32) -> (i32, i32) {
    %c0_i32 = arith.constant 0 : i32
    %c0_i32_0 = arith.constant 0 : i32
    return %arg0, %c0_i32 : i32, i32
  }
  func.func @transform_3(%arg0: i32) -> (i32, i32) {
    %c0_i32 = arith.constant 0 : i32
    %c0_i32_0 = arith.constant 0 : i32
    return %arg0, %c0_i32 : i32, i32
  }
  func.func @transform_4(%arg0: i32) -> (i32, i32) {
    %c0_i32 = arith.constant 0 : i32
    %c0_i32_0 = arith.constant 0 : i32
    return %arg0, %c0_i32 : i32, i32
  }
  func.func @transform_5(%arg0: i32) -> (i32, i32) {
    %c0_i32 = arith.constant 0 : i32
    %c0_i32_0 = arith.constant 0 : i32
    return %arg0, %c0_i32 : i32, i32
  }
  func.func @transform_6(%arg0: i32) -> (i32, i32) {
    %c0_i32 = arith.constant 0 : i32
    %c0_i32_0 = arith.constant 0 : i32
    return %arg0, %c0_i32 : i32, i32
  }
}

</mosaic_0001>

<llo_original>
// kernel: tpu_custom_call.1
$region0: #{tpu_custom_call.1}
  #allocation0 [shape = 'u32[]', space=smem, size = 0x4, offset = 0x4, fixed_abs, tag = 'smem constant byte address 0x4 - core index']
  #allocation1 [shape = 'u32[144,128]{1,0:T(1,128)}', space=vmem, size = 0x12000, scoped, tag = 'internal scratch']
  %s0 = inlined_call_operand.vmem [shape: f32[8,1], index: 0, kind: input, shape index: {}]
  %s1 = inlined_call_operand.vmem [shape: f32[8,1], index: 1, kind: input, shape index: {}]
  %s2 = inlined_call_operand.vmem [shape: f32[8,16], index: 2, kind: input, shape index: {}]
  %s3 = inlined_call_operand.vmem [shape: f32[8,16], index: 3, kind: input, shape index: {}]
  %s4 = inlined_call_operand.vmem [shape: f32[8,64], index: 4, kind: input, shape index: {}]
  %s5 = inlined_call_operand.vmem [shape: f32[8,64], index: 5, kind: input, shape index: {}]
  %s6 = inlined_call_operand.vmem [shape: f32[8,1], index: 6, kind: output, shape index: {}]
  %s7 = sld [smem:[#allocation0]]
  $region34: #{tpu_custom_call.1} parent=0
    _
  %s9 = ssub.s32 1, %s7
  %s10 = scalar_select 0, %s9, %s7
  // Predicated region
  $region2: #{tpu_custom_call.1} parent=0 // pred_check
    _
  $region3: #{tpu_custom_call.1} parent=0 // pred_check_branch
    %12 = sbr.rel (0) target = $region5
  $region4: #{tpu_custom_call.1} parent=0 // pred_region
    _
  $region5: #{tpu_custom_call.1} parent=0 // pred_fallthru
    _
  // Predicated region
  $region6: #{tpu_custom_call.1} parent=0 // pred_check
    _
  $region7: #{tpu_custom_call.1} parent=0 // pred_check_branch
    %14 = sbr.rel (0) target = $region9
  $region8: #{tpu_custom_call.1} parent=0 // pred_region
    _
  $region9: #{tpu_custom_call.1} parent=0 // pred_fallthru
    _
  // Predicated region
  $region10: #{tpu_custom_call.1} parent=0 // pred_check
    _
  $region11: #{tpu_custom_call.1} parent=0 // pred_check_branch
    %16 = sbr.rel (0) target = $region13
  $region12: #{tpu_custom_call.1} parent=0 // pred_region
    _
  $region13: #{tpu_custom_call.1} parent=0 // pred_fallthru
    _
  // Predicated region
  $region14: #{tpu_custom_call.1} parent=0 // pred_check
    _
  $region15: #{tpu_custom_call.1} parent=0 // pred_check_branch
    %18 = sbr.rel (0) target = $region17
  $region16: #{tpu_custom_call.1} parent=0 // pred_region
    _
  $region17: #{tpu_custom_call.1} parent=0 // pred_fallthru
    _
  // Predicated region
  $region18: #{tpu_custom_call.1} parent=0 // pred_check
    _
  $region19: #{tpu_custom_call.1} parent=0 // pred_check_branch
    %20 = sbr.rel (0) target = $region21
  $region20: #{tpu_custom_call.1} parent=0 // pred_region
    _
  $region21: #{tpu_custom_call.1} parent=0 // pred_fallthru
    _
  // Predicated region
  $region22: #{tpu_custom_call.1} parent=0 // pred_check
    _
  $region23: #{tpu_custom_call.1} parent=0 // pred_check_branch
    %22 = sbr.rel (0) target = $region25
  $region24: #{tpu_custom_call.1} parent=0 // pred_region
    _
  $region25: #{tpu_custom_call.1} parent=0 // pred_fallthru
    _
  %v23 = vld [vmem:[%s0] sm:$0xff]
  %v24 = vld [vmem:[%s1] sm:$0xff]
  %v25 = vld [vmem:[%s3] sm:$0xff]
  %v26 = vld [vmem:[%s2] sm:$0xff]
  %v27 = vrcp.pop %v26
  %v28 = vmul.f32 %v25, %v27
  %vm29 = vcmask 130048
  %v30 = vsel %vm29, %v28, 0.0
  %31 = vadd.xlane.f32.xlu0 %v30
  %v32 = vpop.xlane.xlu0 %31
  %v33 = vrcp.pop 16.0
  %v34 = vmul.f32 %v32, %v33
  %v35 = vmul.f32 %v23, %v34
  %v36 = vadd.f32 %v35, %v24
  %v37 = vld [vmem:[%s4] sm:$0xff]
  %vm38 = vcmask 523264
  %v39 = vsel %vm38, %v37, 0.0
  %40 = vadd.xlane.f32.xlu0 %v39
  %v41 = vpop.xlane.xlu0 %40
  %v42 = vrcp.pop 64.0
  %v43 = vmul.f32 %v41, %v42
  %v44 = vld [vmem:[%s5] sm:$0xff]
  %v45 = vmul.f32 %v44, 1.442695
  %v46 = vpow.pop %v45
  %v47 = vsub.f32 1.0, %v46
  %v48 = vadd.f32 %v47, 1e-10
  %v49 = vlog2.pop %v48
  %v50 = vmul.f32 %v49, 0.6931472
  %v51 = vsel %vm38, %v50, 0.0
  %52 = vadd.xlane.f32.xlu0 %v51
  %v53 = vpop.xlane.xlu0 %52
  %v54 = vmul.f32 %v53, %v42
  %v55 = vsub.f32 0.0, %v43
  %v56 = vsub.f32 %v55, %v54
  %v57 = vsub.f32 %v36, %v56
  %vm58 = vcmask 7168
  %59 = vst.msk [vmem:[%s6] sm:$0xff] %vm58, %v57
  // Predicated region
  $region26: #{tpu_custom_call.1} parent=0 // pred_check
    _
  $region27: #{tpu_custom_call.1} parent=0 // pred_check_branch
    %61 = sbr.rel (0) target = $region29
  $region28: #{tpu_custom_call.1} parent=0 // pred_region
    _
  $region29: #{tpu_custom_call.1} parent=0 // pred_fallthru
    _
  // Predicated region
  $region30: #{tpu_custom_call.1} parent=0 // pred_check
    _
  $region31: #{tpu_custom_call.1} parent=0 // pred_check_branch
    %63 = sbr.rel (0) target = $region33
  $region32: #{tpu_custom_call.1} parent=0 // pred_region
    _
  $region33: #{tpu_custom_call.1} parent=0 // pred_fallthru
    _

</llo_original>
